<compile_context>
chip_gen: v7x
topology: tpu7x:2x2x1
jax: 0.10.0
libtpu: 0.0.40
codegen_flags: <defaults>
</compile_context>

<pallas_src>
import functools

import jax
import jax.numpy as jnp
from jax.experimental import pallas as pl
from jax.experimental.pallas import tpu as pltpu


def _channel_attention_kernel(x_ref, w1t_ref, w2t_ref, o_ref, sum_ref, max_ref,
                              *, hw, hw_tile, nb, lane_acc):
    """Grid = (row_blocks, hw_chunks); hw_chunks is the reduction (last) axis.

    x_ref   : (nb, C, hw_tile)  current spatial chunk of nb batch elements
    w1t_ref : (C, Cr)           transposed 1x1-conv weight  (C -> C/r)
    w2t_ref : (Cr, C)           transposed 1x1-conv weight  (C/r -> C)
    o_ref   : (nb, C)           sigmoid attention (written on the last chunk)
    sum_ref : (nb, C, 128) or (nb, C) f32  running spatial sum  (VMEM scratch)
    max_ref : (nb, C, 128) or (nb, C) f32  running spatial max  (VMEM scratch)
    """
    k = pl.program_id(1)
    k_last = pl.num_programs(1) - 1

    @pl.when(k == 0)
    def _init():
        sum_ref[...] = jnp.zeros_like(sum_ref)
        max_ref[...] = jnp.full_like(max_ref, -jnp.inf)

    x = x_ref[...].astype(jnp.float32)              # (nb, C, hw_tile)

    def _accumulate(xs, xm):
        if lane_acc:
            # Lane-resident accumulators: pure VPU adds/maxes on lane-aligned
            # 128-wide columns; the cross-lane reduce happens once in finalize.
            s = sum_ref[...]
            m = max_ref[...]
            for j in range(hw_tile // 128):
                col_s = xs[:, :, j * 128:(j + 1) * 128]
                col_m = xm[:, :, j * 128:(j + 1) * 128]
                s = s + col_s
                m = jnp.maximum(m, col_m)
            sum_ref[...] = s
            max_ref[...] = m
        else:
            # Fallback for very large nb*C: per-chunk XLU cross-lane reduce.
            sum_ref[...] = sum_ref[...] + jnp.sum(xs, axis=-1)
            max_ref[...] = jnp.maximum(max_ref[...], jnp.max(xm, axis=-1))

    if hw % hw_tile != 0:
        # Only the LAST chunk can be ragged: keep every other chunk on the
        # mask-free fast path (no iota/compare/select in the hot loop).
        @pl.when(k < k_last)
        def _full_chunk():
            _accumulate(x, x)

        @pl.when(k == k_last)
        def _tail_chunk():
            lane = jax.lax.broadcasted_iota(jnp.int32, x.shape, 2) + k * hw_tile
            ok = lane < hw
            _accumulate(jnp.where(ok, x, 0.0), jnp.where(ok, x, -jnp.inf))
    else:
        _accumulate(x, x)

    @pl.when(k == k_last)
    def _finalize():
        if lane_acc:
            s = jnp.sum(sum_ref[...], axis=-1)               # (nb, C)
            mx = jnp.max(max_ref[...], axis=-1)              # (nb, C)
        else:
            s = sum_ref[...]
            mx = max_ref[...]
        avg = s * jnp.float32(1.0 / hw)                      # (nb, C)
        # Shared MLP: fuse the avg & max passes into one stacked matmul pair.
        pooled = jnp.concatenate([avg, mx], axis=0)          # (2*nb, C)
        h = jnp.dot(pooled, w1t_ref[...], preferred_element_type=jnp.float32)
        h = jnp.maximum(h, 0.0)                              # ReLU
        logits2 = jnp.dot(h, w2t_ref[...], preferred_element_type=jnp.float32)
        logits = logits2[:nb] + logits2[nb:]                 # (nb, C)
        o_ref[...] = jax.nn.sigmoid(logits).astype(o_ref.dtype)


def _vmem_capacity_bytes():
    """Best-effort per-core VMEM capacity; conservative (v7x-sized) fallback."""
    try:
        info = pltpu.get_tpu_info()
        for attr in ("vmem_capacity_bytes", "vmem_size_bytes", "vmem_bytes"):
            v = getattr(info, attr, None)
            if v:
                return int(v)
    except Exception:
        pass
    return 64 * 1024 * 1024


def channel_attention(x, w1, w2, *, hw_tile=None, batch_block=None):
    """x: (N, C, H, W).  w1: (C//r, C), w2: (C, C//r) — PyTorch Conv2d 1x1
    weights with the trailing 1x1 squeezed.  Returns sigmoid attention of
    shape (N, C, 1, 1)."""
    N, C, H, W = x.shape
    Cr, Cw = w1.shape
    assert Cw == C and w2.shape == (C, Cr)
    HW = H * W
    itemsize = x.dtype.itemsize

    # ---- batch (row) block -------------------------------------------------
    # The output block's sublane dim must be a multiple of 8 or the full batch.
    # Default nb=8 whenever possible so N >= 16 gives >= 2 row blocks and the
    # "parallel" axis feeds both v7x TensorCores.
    if batch_block is None:
        batch_block = 8 if N % 8 == 0 else N
    nb = batch_block
    assert N % nb == 0, "batch_block must divide N"
    # TODO(synk): for N <= 8 the parallel axis has a single block; a 2-way
    # split of the HW reduction with per-core partial scratch would keep both
    # v7x TensorCores busy for small-batch shapes.

    # ---- generation-aware VMEM budget & spatial tile -------------------------
    cap = _vmem_capacity_bytes()              # 64 MiB v7x, 128 MiB v5e/v6e
    vmem_budget = (cap * 3) // 4              # ~48 MiB / ~96 MiB usable

    def fixed_bytes(nb_):
        weight_bytes = 2 * 2 * C * Cr * 4     # two weights, double-buffered
        out_bytes = 2 * nb_ * C * itemsize    # double-buffered output block
        lane_acc_ = (2 * nb_ * C * 128 * 4) <= (8 << 20)
        acc_bytes = 2 * nb_ * C * (128 if lane_acc_ else 1) * 4
        return weight_bytes + out_bytes + acc_bytes + (1 << 20), lane_acc_

    fixed, lane_acc = fixed_bytes(nb)
    # Shrink the batch block if even the minimal (128-lane) tile would blow the
    # budget (keeps nb a multiple of 8 and dividing N).
    while (fixed + 2 * nb * C * 128 * itemsize > vmem_budget
           and nb > 8 and nb % 16 == 0):
        nb //= 2
        fixed, lane_acc = fixed_bytes(nb)
    # TODO(synk): for extreme nb*C even hw_tile=128 may not fit the scoped
    # limit; a C-blocked two-pass design (pool per C-block + tiny MLP kernel)
    # would be required.

    if hw_tile is None:
        # Target ~8 MiB per (double-buffered) x block, capped by the budget.
        x_pair_budget = max(vmem_budget - fixed, 2 * nb * C * 128 * itemsize)
        target_block = min(8 << 20, x_pair_budget // 2)
        lanes = (target_block // (nb * C * itemsize)) // 128 * 128
        lanes = max(128, lanes)
        hw_tile = min(lanes, pl.cdiv(HW, 128) * 128)
    hw_tile = max(128, (hw_tile // 128) * 128)

    x3 = x.reshape(N, C, HW)          # channels on sublanes, spatial on lanes
    w1t = jnp.transpose(w1)           # (C, Cr)
    w2t = jnp.transpose(w2)           # (Cr, C)

    n_row = N // nb
    n_k = pl.cdiv(HW, hw_tile)

    acc_shape = (nb, C, 128) if lane_acc else (nb, C)

    kernel = functools.partial(
        _channel_attention_kernel,
        hw=HW, hw_tile=hw_tile, nb=nb, lane_acc=lane_acc)

    out = pl.pallas_call(
        kernel,
        out_shape=jax.ShapeDtypeStruct((N, C), x.dtype),
        grid_spec=pltpu.PrefetchScalarGridSpec(
            num_scalar_prefetch=0,
            grid=(n_row, n_k),
            in_specs=[
                pl.BlockSpec((nb, C, hw_tile), lambda r, k: (r, 0, k)),
                # TODO(synk): single-buffer the constant weight blocks
                # (pipeline_mode=pl.Buffered(1)) to free a little more VMEM.
                pl.BlockSpec((C, Cr), lambda r, k: (0, 0)),   # fetched once
                pl.BlockSpec((Cr, C), lambda r, k: (0, 0)),
            ],
            out_specs=pl.BlockSpec((nb, C), lambda r, k: (r, 0)),
            scratch_shapes=[
                pltpu.VMEM(acc_shape, jnp.float32),   # running sum
                pltpu.VMEM(acc_shape, jnp.float32),   # running max
            ],
        ),
        compiler_params=pltpu.CompilerParams(
            dimension_semantics=("parallel", "arbitrary"),
            vmem_limit_bytes=int(vmem_budget),
        ),
    )(x3, w1t, w2t)

    return out.reshape(N, C, 1, 1)


def channel_attention_ref(x, w1, w2):
    """Pure-JAX reference mirroring the PyTorch forward."""
    avg = jnp.mean(x, axis=(2, 3))                      # (N, C)
    mx = jnp.max(x, axis=(2, 3))                        # (N, C)

    def mlp(v):
        h = jnp.maximum(v @ w1.T, 0.0)
        return h @ w2.T

    return jax.nn.sigmoid(mlp(avg) + mlp(mx)).reshape(x.shape[0], x.shape[1], 1, 1)


if __name__ == "__main__":
    key = jax.random.PRNGKey(0)
    kx, k1, k2, kx2 = jax.random.split(key, 4)

    # Small shapes consistent with the module (channel must be >= ratio).
    N, C, H, W = 2, 64, 16, 16
    ratio = 16
    Cr = C // ratio   # 4

    x = jax.random.normal(kx, (N, C, H, W), dtype=jnp.float32)
    # Conv2d(C, C//r, 1, bias=False).weight: (C//r, C, 1, 1) -> squeeze to (C//r, C)
    w1 = jax.random.normal(k1, (Cr, C), dtype=jnp.float32) * 0.1
    # Conv2d(C//r, C, 1, bias=False).weight: (C, C//r, 1, 1) -> squeeze to (C, C//r)
    w2 = jax.random.normal(k2, (C, Cr), dtype=jnp.float32) * 0.1

    out = channel_attention(x, w1, w2)
    out = jax.block_until_ready(out)
    ref = channel_attention_ref(x, w1, w2)
    assert out.shape == (N, C, 1, 1)
    assert jnp.allclose(out, ref, atol=1e-5, rtol=1e-5), "mismatch vs JAX reference"

    # Ragged-spatial case (H*W not a multiple of the 128-lane tile) exercises
    # the pl.when-gated tail-chunk masking path.
    H2, W2 = 10, 10
    x2 = jax.random.normal(kx2, (N, C, H2, W2), dtype=jnp.float32)
    out2 = jax.block_until_ready(channel_attention(x2, w1, w2))
    ref2 = channel_attention_ref(x2, w1, w2)
    assert jnp.allclose(out2, ref2, atol=1e-5, rtol=1e-5), "mismatch (ragged HW)"

    print("KERNEL_OK")
</pallas_src>

<mosaic_0001>
module attributes {stable_mosaic.version = 11 : i64} {
  func.func @_channel_attention_kernel(%arg0: i32, %arg1: i32, %arg2: memref<2x64x256xf32, #tpu.memory_space<vmem>>, %arg3: memref<64x4xf32, #tpu.memory_space<vmem>>, %arg4: memref<4x64xf32, #tpu.memory_space<vmem>>, %arg5: memref<2x64xf32, #tpu.memory_space<vmem>>, %arg6: memref<2x64x128xf32, #tpu.memory_space<vmem>>, %arg7: memref<2x64x128xf32, #tpu.memory_space<vmem>>) attributes {dimension_semantics = [#tpu.dimension_semantics<parallel>, #tpu.dimension_semantics<arbitrary>], iteration_bounds = array<i64: 1, 1>, scalar_prefetch = 0 : i64, scratch_operands = 2 : i64, tpu.core_type = #tpu.core_type<tc>, window_params = [{transform_indices = @transform_0, window_bounds = array<i64: 2, 64, 256>}, {pipeline_mode = #tpu.pipeline_mode<synchronous>, transform_indices = @transform_1, window_bounds = array<i64: 64, 4>}, {pipeline_mode = #tpu.pipeline_mode<synchronous>, transform_indices = @transform_2, window_bounds = array<i64: 4, 64>}, {transform_indices = @transform_3, window_bounds = array<i64: 2, 64>}]} {
    %c0_i32 = arith.constant 0 : i32
    %0 = arith.cmpi eq, %arg1, %c0_i32 : i32
    %1 = arith.extui %0 : i1 to i32
    %c0_i32_0 = arith.constant 0 : i32
    %2 = arith.cmpi ne, %1, %c0_i32_0 : i32
    scf.if %2 {
      %cst = arith.constant 0.000000e+00 : f32
      %19 = vector.broadcast %cst : f32 to vector<2x64x128xf32>
      %c0_17 = arith.constant 0 : index
      %c0_18 = arith.constant 0 : index
      %c0_19 = arith.constant 0 : index
      %20 = vector.load %arg6[%c0_17, %c0_18, %c0_19] : memref<2x64x128xf32, #tpu.memory_space<vmem>>, vector<2x64x128xf32>
      tpu.vector_store %arg6[%c0_17, %c0_18, %c0_19], %19 {strides = array<i32>} : memref<2x64x128xf32, #tpu.memory_space<vmem>>, vector<2x64x128xf32>,
      %cst_20 = arith.constant 0xFF800000 : f32
      %21 = vector.broadcast %cst_20 : f32 to vector<2x64x128xf32>
      %c0_21 = arith.constant 0 : index
      %c0_22 = arith.constant 0 : index
      %c0_23 = arith.constant 0 : index
      %22 = vector.load %arg7[%c0_21, %c0_22, %c0_23] : memref<2x64x128xf32, #tpu.memory_space<vmem>>, vector<2x64x128xf32>
      tpu.vector_store %arg7[%c0_21, %c0_22, %c0_23], %21 {strides = array<i32>} : memref<2x64x128xf32, #tpu.memory_space<vmem>>, vector<2x64x128xf32>,
    } else {
    }
    %c0 = arith.constant 0 : index
    %c0_1 = arith.constant 0 : index
    %c0_2 = arith.constant 0 : index
    %3 = vector.load %arg2[%c0, %c0_1, %c0_2] : memref<2x64x256xf32, #tpu.memory_space<vmem>>, vector<2x64x256xf32>
    %c0_3 = arith.constant 0 : index
    %c0_4 = arith.constant 0 : index
    %c0_5 = arith.constant 0 : index
    %4 = vector.load %arg6[%c0_3, %c0_4, %c0_5] : memref<2x64x128xf32, #tpu.memory_space<vmem>>, vector<2x64x128xf32>
    %c0_6 = arith.constant 0 : index
    %c0_7 = arith.constant 0 : index
    %c0_8 = arith.constant 0 : index
    %5 = vector.load %arg7[%c0_6, %c0_7, %c0_8] : memref<2x64x128xf32, #tpu.memory_space<vmem>>, vector<2x64x128xf32>
    %6 = vector.extract_strided_slice %3 {offsets = [0, 0, 0], sizes = [2, 64, 128], strides = [1, 1, 1]} : vector<2x64x256xf32> to vector<2x64x128xf32>
    %7 = vector.extract_strided_slice %3 {offsets = [0, 0, 0], sizes = [2, 64, 128], strides = [1, 1, 1]} : vector<2x64x256xf32> to vector<2x64x128xf32>
    %8 = arith.addf %4, %6 : vector<2x64x128xf32>
    %9 = arith.maximumf %5, %7 : vector<2x64x128xf32>
    %10 = vector.extract_strided_slice %3 {offsets = [0, 0, 128], sizes = [2, 64, 128], strides = [1, 1, 1]} : vector<2x64x256xf32> to vector<2x64x128xf32>
    %11 = vector.extract_strided_slice %3 {offsets = [0, 0, 128], sizes = [2, 64, 128], strides = [1, 1, 1]} : vector<2x64x256xf32> to vector<2x64x128xf32>
    %12 = arith.addf %8, %10 : vector<2x64x128xf32>
    %13 = arith.maximumf %9, %11 : vector<2x64x128xf32>
    %c0_9 = arith.constant 0 : index
    %c0_10 = arith.constant 0 : index
    %c0_11 = arith.constant 0 : index
    %14 = vector.load %arg6[%c0_9, %c0_10, %c0_11] : memref<2x64x128xf32, #tpu.memory_space<vmem>>, vector<2x64x128xf32>
    tpu.vector_store %arg6[%c0_9, %c0_10, %c0_11], %12 {strides = array<i32>} : memref<2x64x128xf32, #tpu.memory_space<vmem>>, vector<2x64x128xf32>,
    %c0_12 = arith.constant 0 : index
    %c0_13 = arith.constant 0 : index
    %c0_14 = arith.constant 0 : index
    %15 = vector.load %arg7[%c0_12, %c0_13, %c0_14] : memref<2x64x128xf32, #tpu.memory_space<vmem>>, vector<2x64x128xf32>
    tpu.vector_store %arg7[%c0_12, %c0_13, %c0_14], %13 {strides = array<i32>} : memref<2x64x128xf32, #tpu.memory_space<vmem>>, vector<2x64x128xf32>,
    %c0_i32_15 = arith.constant 0 : i32
    %16 = arith.cmpi eq, %arg1, %c0_i32_15 : i32
    %17 = arith.extui %16 : i1 to i32
    %c0_i32_16 = arith.constant 0 : i32
    %18 = arith.cmpi ne, %17, %c0_i32_16 : i32
    scf.if %18 {
      %c0_17 = arith.constant 0 : index
      %c0_18 = arith.constant 0 : index
      %c0_19 = arith.constant 0 : index
      %19 = vector.load %arg6[%c0_17, %c0_18, %c0_19] : memref<2x64x128xf32, #tpu.memory_space<vmem>>, vector<2x64x128xf32>
      %cst = arith.constant dense<0.000000e+00> : vector<2x64xf32>
      %20 = vector.multi_reduction <add>, %19, %cst [2] : vector<2x64x128xf32> to vector<2x64xf32>
      %c0_20 = arith.constant 0 : index
      %c0_21 = arith.constant 0 : index
      %c0_22 = arith.constant 0 : index
      %21 = vector.load %arg7[%c0_20, %c0_21, %c0_22] : memref<2x64x128xf32, #tpu.memory_space<vmem>>, vector<2x64x128xf32>
      %cst_23 = arith.constant dense<0xFF800000> : vector<2x64xf32>
      %22 = vector.multi_reduction <maximumf>, %21, %cst_23 [2] : vector<2x64x128xf32> to vector<2x64xf32>
      %cst_24 = arith.constant 3.906250e-03 : f32
      %23 = vector.broadcast %cst_24 : f32 to vector<2x64xf32>
      %24 = arith.mulf %20, %23 : vector<2x64xf32>
      %25 = tpu.concatenate %24, %22 in 0 : vector<2x64xf32>, vector<2x64xf32> -> vector<4x64xf32>
      %c0_25 = arith.constant 0 : index
      %c0_26 = arith.constant 0 : index
      %26 = vector.load %arg3[%c0_25, %c0_26] : memref<64x4xf32, #tpu.memory_space<vmem>>, vector<64x4xf32>
      %cst_27 = arith.constant dense<0.000000e+00> : vector<4x4xf32>
      %27 = tpu.matmul %25, %26, %cst_27 {dimension_numbers = #tpu.dot_dimension_numbers<[1], [0], [0], [1], [0, 0, 1, 1], [], []>} : vector<4x64xf32>, vector<64x4xf32>, vector<4x4xf32> -> vector<4x4xf32>
      %cst_28 = arith.constant 0.000000e+00 : f32
      %28 = vector.broadcast %cst_28 : f32 to vector<4x4xf32>
      %29 = arith.maximumf %27, %28 : vector<4x4xf32>
      %c0_29 = arith.constant 0 : index
      %c0_30 = arith.constant 0 : index
      %30 = vector.load %arg4[%c0_29, %c0_30] : memref<4x64xf32, #tpu.memory_space<vmem>>, vector<4x64xf32>
      %cst_31 = arith.constant dense<0.000000e+00> : vector<4x64xf32>
      %31 = tpu.matmul %29, %30, %cst_31 {dimension_numbers = #tpu.dot_dimension_numbers<[1], [0], [0], [1], [0, 0, 1, 1], [], []>} : vector<4x4xf32>, vector<4x64xf32>, vector<4x64xf32> -> vector<4x64xf32>
      %32 = vector.extract_strided_slice %31 {offsets = [0, 0], sizes = [2, 64], strides = [1, 1]} : vector<4x64xf32> to vector<2x64xf32>
      %33 = vector.extract_strided_slice %31 {offsets = [2, 0], sizes = [2, 64], strides = [1, 1]} : vector<4x64xf32> to vector<2x64xf32>
      %34 = arith.addf %32, %33 : vector<2x64xf32>
      %35 = arith.negf %34 : vector<2x64xf32>
      %36 = math.exp %35 : vector<2x64xf32>
      %cst_32 = arith.constant 1.000000e+00 : f32
      %37 = vector.broadcast %cst_32 : f32 to vector<2x64xf32>
      %38 = arith.addf %37, %36 : vector<2x64xf32>
      %39 = arith.divf %37, %38 : vector<2x64xf32>
      %c0_33 = arith.constant 0 : index
      %c0_34 = arith.constant 0 : index
      %40 = vector.load %arg5[%c0_33, %c0_34] : memref<2x64xf32, #tpu.memory_space<vmem>>, vector<2x64xf32>
      tpu.vector_store %arg5[%c0_33, %c0_34], %39 {strides = array<i32>} : memref<2x64xf32, #tpu.memory_space<vmem>>, vector<2x64xf32>,
    } else {
    }
    return
  }
  func.func @transform_0(%arg0: i32, %arg1: i32) -> (i32, i32, i32) {
    %c0_i32 = arith.constant 0 : i32
    %c0_i32_0 = arith.constant 0 : i32
    return %arg0, %c0_i32, %arg1 : i32, i32, i32
  }
  func.func @transform_1(%arg0: i32, %arg1: i32) -> (i32, i32) {
    %c0_i32 = arith.constant 0 : i32
    %c0_i32_0 = arith.constant 0 : i32
    %c0_i32_1 = arith.constant 0 : i32
    return %c0_i32, %c0_i32_0 : i32, i32
  }
  func.func @transform_2(%arg0: i32, %arg1: i32) -> (i32, i32) {
    %c0_i32 = arith.constant 0 : i32
    %c0_i32_0 = arith.constant 0 : i32
    %c0_i32_1 = arith.constant 0 : i32
    return %c0_i32, %c0_i32_0 : i32, i32
  }
  func.func @transform_3(%arg0: i32, %arg1: i32) -> (i32, i32) {
    %c0_i32 = arith.constant 0 : i32
    %c0_i32_0 = arith.constant 0 : i32
    return %arg0, %c0_i32 : i32, i32
  }
}

</mosaic_0001>

<llo_original>
// kernel: tpu_custom_call.1
$region0: #{tpu_custom_call.1}
  #allocation0 [shape = 'u32[]', space=smem, size = 0x4, offset = 0x4, fixed_abs, tag = 'smem constant byte address 0x4 - core index']
  #allocation1 [shape = 'u32[144,128]{1,0:T(1,128)}', space=vmem, size = 0x12000, scoped, tag = 'internal scratch']
  #allocation2 [shape = 'f32[2,64,128]{2,1,0:T(8,128)}', space=vmem, size = 0x10000, scoped, tag = 'scratch operand']
  #allocation3 [shape = 'f32[2,64,128]{2,1,0:T(8,128)}', space=vmem, size = 0x10000, scoped, tag = 'scratch operand']
  %s0 = inlined_call_operand.hbm [shape: f32[2,64,256], index: 0, kind: input, shape index: {}]
  %s1 = inlined_call_operand.vmem [shape: f32[64,4], index: 1, kind: input, shape index: {}]
  %s2 = inlined_call_operand.vmem [shape: f32[4,64], index: 2, kind: input, shape index: {}]
  %s3 = inlined_call_operand.hbm [shape: f32[2,64], index: 3, kind: output, shape index: {}]
  %s4 = sld [smem:[#allocation0]]
  $region34: #{tpu_custom_call.1} parent=0
    _
  %s6 = ssub.s32 1, %s4
  %s7 = scalar_select 0, %s6, %s4
  $region1: #{tpu_custom_call.1} parent=0
    #allocation4 [shape = 'u8[131072]{0}', space=vmem, size = 0x20000, scoped, tag = 'input window, operand 0, single buffered']
    #allocation5 [shape = 's32[1]{0}', space=sflag, size = 0x4, scoped, tag = 'scoped memory for tpu_custom_call.1']
    #allocation6 [shape = 's32[1]{0}', space=sflag, size = 0x4, scoped, tag = 'scoped memory for tpu_custom_call.1']
    #allocation7 [shape = 'u8[1024]{0}', space=vmem, size = 0x400, scoped, tag = 'output window, operand 0, single buffered']
    %8 = vsyncpa [#allocation5], 0
    %9 = vsyncpa [#allocation6], 0
    // Predicated region
    $region2: #{tpu_custom_call.1} parent=1 // pred_check
      _
    $region3: #{tpu_custom_call.1} parent=1 // pred_check_branch
      %11 = sbr.rel (0) target = $region5
    $region4: #{tpu_custom_call.1} parent=1 // pred_region
      %s13 = ssub.s32 4096, 4096
      %14 = vsyncadd [#allocation5], %s13
      %s15 = sshll.u32 [#allocation4], 4
      %s16 = int_to_ptr.vmem [resolvable:$true] %s15
      %21 = dma.hbm_to_vmem [thread:$0]  %s0, 4096, %s16, [#allocation5], 256, 256, 16
    $region5: #{tpu_custom_call.1} parent=1 // pred_fallthru
      _
    // Predicated region
    $region6: #{tpu_custom_call.1} parent=1 // pred_check
      _
    $region7: #{tpu_custom_call.1} parent=1 // pred_check_branch
      %23 = sbr.rel (0) target = $region9
    $region8: #{tpu_custom_call.1} parent=1 // pred_region
      _
    $region9: #{tpu_custom_call.1} parent=1 // pred_fallthru
      _
    // Predicated region
    $region10: #{tpu_custom_call.1} parent=1 // pred_check
      _
    $region11: #{tpu_custom_call.1} parent=1 // pred_check_branch
      %25 = sbr.rel (0) target = $region13
    $region12: #{tpu_custom_call.1} parent=1 // pred_region
      _
    $region13: #{tpu_custom_call.1} parent=1 // pred_fallthru
      _
    // Predicated region
    $region14: #{tpu_custom_call.1} parent=1 // pred_check
      _
    $region15: #{tpu_custom_call.1} parent=1 // pred_check_branch
      %27 = sbr.rel (0) target = $region17
    $region16: #{tpu_custom_call.1} parent=1 // pred_region
      %28 = dma.done [#allocation5], 4096
    $region17: #{tpu_custom_call.1} parent=1 // pred_fallthru
      _
    %p29 = scmp.eq.s32.totalorder 0, 0
    // Predicated region
    $region18: #{tpu_custom_call.1} parent=1 // pred_check
      %p30 = pneg %p29
    $region19: #{tpu_custom_call.1} parent=1 // pred_check_branch
      %32 = sbr.rel (%p30) target = $region21
    $region20: #{tpu_custom_call.1} parent=1 // pred_region
      %33 = vst [vmem:[#allocation2] sm:$0xff] 0.0
      %34 = vst [vmem:[#allocation2 + $0x8] sm:$0xff] 0.0
      %35 = vst [vmem:[#allocation2 + $0x10] sm:$0xff] 0.0
      %36 = vst [vmem:[#allocation2 + $0x18] sm:$0xff] 0.0
      %37 = vst [vmem:[#allocation2 + $0x20] sm:$0xff] 0.0
      %38 = vst [vmem:[#allocation2 + $0x28] sm:$0xff] 0.0
      %39 = vst [vmem:[#allocation2 + $0x30] sm:$0xff] 0.0
      %40 = vst [vmem:[#allocation2 + $0x38] sm:$0xff] 0.0
      %41 = vst [vmem:[#allocation2 + $0x40] sm:$0xff] 0.0
      %42 = vst [vmem:[#allocation2 + $0x48] sm:$0xff] 0.0
      %43 = vst [vmem:[#allocation2 + $0x50] sm:$0xff] 0.0
      %44 = vst [vmem:[#allocation2 + $0x58] sm:$0xff] 0.0
      %45 = vst [vmem:[#allocation2 + $0x60] sm:$0xff] 0.0
      %46 = vst [vmem:[#allocation2 + $0x68] sm:$0xff] 0.0
      %47 = vst [vmem:[#allocation2 + $0x70] sm:$0xff] 0.0
      %48 = vst [vmem:[#allocation2 + $0x78] sm:$0xff] 0.0
      %49 = vst [vmem:[#allocation3] sm:$0xff] -inf
      %50 = vst [vmem:[#allocation3 + $0x8] sm:$0xff] -inf
      %51 = vst [vmem:[#allocation3 + $0x10] sm:$0xff] -inf
      %52 = vst [vmem:[#allocation3 + $0x18] sm:$0xff] -inf
      %53 = vst [vmem:[#allocation3 + $0x20] sm:$0xff] -inf
      %54 = vst [vmem:[#allocation3 + $0x28] sm:$0xff] -inf
      %55 = vst [vmem:[#allocation3 + $0x30] sm:$0xff] -inf
      %56 = vst [vmem:[#allocation3 + $0x38] sm:$0xff] -inf
      %57 = vst [vmem:[#allocation3 + $0x40] sm:$0xff] -inf
      %58 = vst [vmem:[#allocation3 + $0x48] sm:$0xff] -inf
      %59 = vst [vmem:[#allocation3 + $0x50] sm:$0xff] -inf
      %60 = vst [vmem:[#allocation3 + $0x58] sm:$0xff] -inf
      %61 = vst [vmem:[#allocation3 + $0x60] sm:$0xff] -inf
      %62 = vst [vmem:[#allocation3 + $0x68] sm:$0xff] -inf
      %63 = vst [vmem:[#allocation3 + $0x70] sm:$0xff] -inf
      %64 = vst [vmem:[#allocation3 + $0x78] sm:$0xff] -inf
    $region21: #{tpu_custom_call.1} parent=1 // pred_fallthru
      _
    %v65 = vld [vmem:[#allocation4] sm:$0xff]
    %v66 = vld [vmem:[#allocation4 + $0x8] sm:$0xff]
    %v67 = vld [vmem:[#allocation4 + $0x10] sm:$0xff]
    %v68 = vld [vmem:[#allocation4 + $0x18] sm:$0xff]
    %v69 = vld [vmem:[#allocation4 + $0x20] sm:$0xff]
    %v70 = vld [vmem:[#allocation4 + $0x28] sm:$0xff]
    %v71 = vld [vmem:[#allocation4 + $0x30] sm:$0xff]
    %v72 = vld [vmem:[#allocation4 + $0x38] sm:$0xff]
    %v73 = vld [vmem:[#allocation4 + $0x40] sm:$0xff]
    %v74 = vld [vmem:[#allocation4 + $0x48] sm:$0xff]
    %v75 = vld [vmem:[#allocation4 + $0x50] sm:$0xff]
    %v76 = vld [vmem:[#allocation4 + $0x58] sm:$0xff]
    %v77 = vld [vmem:[#allocation4 + $0x60] sm:$0xff]
    %v78 = vld [vmem:[#allocation4 + $0x68] sm:$0xff]
    %v79 = vld [vmem:[#allocation4 + $0x70] sm:$0xff]
    %v80 = vld [vmem:[#allocation4 + $0x78] sm:$0xff]
    %v81 = vld [vmem:[#allocation4 + $0x80] sm:$0xff]
    %v82 = vld [vmem:[#allocation4 + $0x88] sm:$0xff]
    %v83 = vld [vmem:[#allocation4 + $0x90] sm:$0xff]
    %v84 = vld [vmem:[#allocation4 + $0x98] sm:$0xff]
    %v85 = vld [vmem:[#allocation4 + $0xa0] sm:$0xff]
    %v86 = vld [vmem:[#allocation4 + $0xa8] sm:$0xff]
    %v87 = vld [vmem:[#allocation4 + $0xb0] sm:$0xff]
    %v88 = vld [vmem:[#allocation4 + $0xb8] sm:$0xff]
    %v89 = vld [vmem:[#allocation4 + $0xc0] sm:$0xff]
    %v90 = vld [vmem:[#allocation4 + $0xc8] sm:$0xff]
    %v91 = vld [vmem:[#allocation4 + $0xd0] sm:$0xff]
    %v92 = vld [vmem:[#allocation4 + $0xd8] sm:$0xff]
    %v93 = vld [vmem:[#allocation4 + $0xe0] sm:$0xff]
    %v94 = vld [vmem:[#allocation4 + $0xe8] sm:$0xff]
    %v95 = vld [vmem:[#allocation4 + $0xf0] sm:$0xff]
    %v96 = vld [vmem:[#allocation4 + $0xf8] sm:$0xff]
    %v97 = vld [vmem:[#allocation2] sm:$0xff]
    %v98 = vld [vmem:[#allocation2 + $0x8] sm:$0xff]
    %v99 = vld [vmem:[#allocation2 + $0x10] sm:$0xff]
    %v100 = vld [vmem:[#allocation2 + $0x18] sm:$0xff]
    %v101 = vld [vmem:[#allocation2 + $0x20] sm:$0xff]
    %v102 = vld [vmem:[#allocation2 + $0x28] sm:$0xff]
    %v103 = vld [vmem:[#allocation2 + $0x30] sm:$0xff]
    %v104 = vld [vmem:[#allocation2 + $0x38] sm:$0xff]
    %v105 = vld [vmem:[#allocation2 + $0x40] sm:$0xff]
    %v106 = vld [vmem:[#allocation2 + $0x48] sm:$0xff]
    %v107 = vld [vmem:[#allocation2 + $0x50] sm:$0xff]
    %v108 = vld [vmem:[#allocation2 + $0x58] sm:$0xff]
    %v109 = vld [vmem:[#allocation2 + $0x60] sm:$0xff]
    %v110 = vld [vmem:[#allocation2 + $0x68] sm:$0xff]
    %v111 = vld [vmem:[#allocation2 + $0x70] sm:$0xff]
    %v112 = vld [vmem:[#allocation2 + $0x78] sm:$0xff]
    %v113 = vld [vmem:[#allocation3] sm:$0xff]
    %v114 = vld [vmem:[#allocation3 + $0x8] sm:$0xff]
    %v115 = vld [vmem:[#allocation3 + $0x10] sm:$0xff]
    %v116 = vld [vmem:[#allocation3 + $0x18] sm:$0xff]
    %v117 = vld [vmem:[#allocation3 + $0x20] sm:$0xff]
    %v118 = vld [vmem:[#allocation3 + $0x28] sm:$0xff]
    %v119 = vld [vmem:[#allocation3 + $0x30] sm:$0xff]
    %v120 = vld [vmem:[#allocation3 + $0x38] sm:$0xff]
    %v121 = vld [vmem:[#allocation3 + $0x40] sm:$0xff]
    %v122 = vld [vmem:[#allocation3 + $0x48] sm:$0xff]
    %v123 = vld [vmem:[#allocation3 + $0x50] sm:$0xff]
    %v124 = vld [vmem:[#allocation3 + $0x58] sm:$0xff]
    %v125 = vld [vmem:[#allocation3 + $0x60] sm:$0xff]
    %v126 = vld [vmem:[#allocation3 + $0x68] sm:$0xff]
    %v127 = vld [vmem:[#allocation3 + $0x70] sm:$0xff]
    %v128 = vld [vmem:[#allocation3 + $0x78] sm:$0xff]
    %v129 = vadd.f32 %v97, %v65
    %v130 = vadd.f32 %v98, %v67
    %v131 = vadd.f32 %v99, %v69
    %v132 = vadd.f32 %v100, %v71
    %v133 = vadd.f32 %v101, %v73
    %v134 = vadd.f32 %v102, %v75
    %v135 = vadd.f32 %v103, %v77
    %v136 = vadd.f32 %v104, %v79
    %v137 = vadd.f32 %v105, %v81
    %v138 = vadd.f32 %v106, %v83
    %v139 = vadd.f32 %v107, %v85
    %v140 = vadd.f32 %v108, %v87
    %v141 = vadd.f32 %v109, %v89
    %v142 = vadd.f32 %v110, %v91
    %v143 = vadd.f32 %v111, %v93
    %v144 = vadd.f32 %v112, %v95
    %v145 = vmax.f32 %v113, %v65
    %v146 = vmax.f32 %v114, %v67
    %v147 = vmax.f32 %v115, %v69
    %v148 = vmax.f32 %v116, %v71
    %v149 = vmax.f32 %v117, %v73
    %v150 = vmax.f32 %v118, %v75
    %v151 = vmax.f32 %v119, %v77
    %v152 = vmax.f32 %v120, %v79
    %v153 = vmax.f32 %v121, %v81
    %v154 = vmax.f32 %v122, %v83
    %v155 = vmax.f32 %v123, %v85
    %v156 = vmax.f32 %v124, %v87
    %v157 = vmax.f32 %v125, %v89
    %v158 = vmax.f32 %v126, %v91
    %v159 = vmax.f32 %v127, %v93
    %v160 = vmax.f32 %v128, %v95
    %v161 = vadd.f32 %v129, %v66
    %v162 = vadd.f32 %v130, %v68
    %v163 = vadd.f32 %v131, %v70
    %v164 = vadd.f32 %v132, %v72
    %v165 = vadd.f32 %v133, %v74
    %v166 = vadd.f32 %v134, %v76
    %v167 = vadd.f32 %v135, %v78
    %v168 = vadd.f32 %v136, %v80
    %v169 = vadd.f32 %v137, %v82
    %v170 = vadd.f32 %v138, %v84
    %v171 = vadd.f32 %v139, %v86
    %v172 = vadd.f32 %v140, %v88
    %v173 = vadd.f32 %v141, %v90
    %v174 = vadd.f32 %v142, %v92
    %v175 = vadd.f32 %v143, %v94
    %v176 = vadd.f32 %v144, %v96
    %v177 = vmax.f32 %v145, %v66
    %v178 = vmax.f32 %v146, %v68
    %v179 = vmax.f32 %v147, %v70
    %v180 = vmax.f32 %v148, %v72
    %v181 = vmax.f32 %v149, %v74
    %v182 = vmax.f32 %v150, %v76
    %v183 = vmax.f32 %v151, %v78
    %v184 = vmax.f32 %v152, %v80
    %v185 = vmax.f32 %v153, %v82
    %v186 = vmax.f32 %v154, %v84
    %v187 = vmax.f32 %v155, %v86
    %v188 = vmax.f32 %v156, %v88
    %v189 = vmax.f32 %v157, %v90
    %v190 = vmax.f32 %v158, %v92
    %v191 = vmax.f32 %v159, %v94
    %v192 = vmax.f32 %v160, %v96
    %193 = vst [vmem:[#allocation2] sm:$0xff] %v161
    %194 = vst [vmem:[#allocation2 + $0x8] sm:$0xff] %v162
    %195 = vst [vmem:[#allocation2 + $0x10] sm:$0xff] %v163
    %196 = vst [vmem:[#allocation2 + $0x18] sm:$0xff] %v164
    %197 = vst [vmem:[#allocation2 + $0x20] sm:$0xff] %v165
    %198 = vst [vmem:[#allocation2 + $0x28] sm:$0xff] %v166
    %199 = vst [vmem:[#allocation2 + $0x30] sm:$0xff] %v167
    %200 = vst [vmem:[#allocation2 + $0x38] sm:$0xff] %v168
    %201 = vst [vmem:[#allocation2 + $0x40] sm:$0xff] %v169
    %202 = vst [vmem:[#allocation2 + $0x48] sm:$0xff] %v170
    %203 = vst [vmem:[#allocation2 + $0x50] sm:$0xff] %v171
    %204 = vst [vmem:[#allocation2 + $0x58] sm:$0xff] %v172
    %205 = vst [vmem:[#allocation2 + $0x60] sm:$0xff] %v173
    %206 = vst [vmem:[#allocation2 + $0x68] sm:$0xff] %v174
    %207 = vst [vmem:[#allocation2 + $0x70] sm:$0xff] %v175
    %208 = vst [vmem:[#allocation2 + $0x78] sm:$0xff] %v176
    %209 = vst [vmem:[#allocation3] sm:$0xff] %v177
    %210 = vst [vmem:[#allocation3 + $0x8] sm:$0xff] %v178
    %211 = vst [vmem:[#allocation3 + $0x10] sm:$0xff] %v179
    %212 = vst [vmem:[#allocation3 + $0x18] sm:$0xff] %v180
    %213 = vst [vmem:[#allocation3 + $0x20] sm:$0xff] %v181
    %214 = vst [vmem:[#allocation3 + $0x28] sm:$0xff] %v182
    %215 = vst [vmem:[#allocation3 + $0x30] sm:$0xff] %v183
    %216 = vst [vmem:[#allocation3 + $0x38] sm:$0xff] %v184
    %217 = vst [vmem:[#allocation3 + $0x40] sm:$0xff] %v185
    %218 = vst [vmem:[#allocation3 + $0x48] sm:$0xff] %v186
    %219 = vst [vmem:[#allocation3 + $0x50] sm:$0xff] %v187
    %220 = vst [vmem:[#allocation3 + $0x58] sm:$0xff] %v188
    %221 = vst [vmem:[#allocation3 + $0x60] sm:$0xff] %v189
    %222 = vst [vmem:[#allocation3 + $0x68] sm:$0xff] %v190
    %223 = vst [vmem:[#allocation3 + $0x70] sm:$0xff] %v191
    %224 = vst [vmem:[#allocation3 + $0x78] sm:$0xff] %v192
    // Predicated region
    $region22: #{tpu_custom_call.1} parent=1 // pred_check
      %p225 = pneg %p29
    $region23: #{tpu_custom_call.1} parent=1 // pred_check_branch
      %227 = sbr.rel (%p225) target = $region25
    $region24: #{tpu_custom_call.1} parent=1 // pred_region
      %v228 = vld [vmem:[#allocation2] sm:$0xff]
      %v229 = vld [vmem:[#allocation2 + $0x8] sm:$0xff]
      %v230 = vld [vmem:[#allocation2 + $0x10] sm:$0xff]
      %v231 = vld [vmem:[#allocation2 + $0x18] sm:$0xff]
      %v232 = vld [vmem:[#allocation2 + $0x20] sm:$0xff]
      %v233 = vld [vmem:[#allocation2 + $0x28] sm:$0xff]
      %v234 = vld [vmem:[#allocation2 + $0x30] sm:$0xff]
      %v235 = vld [vmem:[#allocation2 + $0x38] sm:$0xff]
      %v236 = vld [vmem:[#allocation2 + $0x40] sm:$0xff]
      %v237 = vld [vmem:[#allocation2 + $0x48] sm:$0xff]
      %v238 = vld [vmem:[#allocation2 + $0x50] sm:$0xff]
      %v239 = vld [vmem:[#allocation2 + $0x58] sm:$0xff]
      %v240 = vld [vmem:[#allocation2 + $0x60] sm:$0xff]
      %v241 = vld [vmem:[#allocation2 + $0x68] sm:$0xff]
      %v242 = vld [vmem:[#allocation2 + $0x70] sm:$0xff]
      %v243 = vld [vmem:[#allocation2 + $0x78] sm:$0xff]
      %244 = vadd.xlane.f32.xlu0 %v228
      %v245 = vpop.xlane.xlu0 %244
      %246 = vadd.xlane.f32.xlu0 %v229
      %v247 = vpop.xlane.xlu0 %246
      %248 = vadd.xlane.f32.xlu0 %v230
      %v249 = vpop.xlane.xlu0 %248
      %250 = vadd.xlane.f32.xlu0 %v231
      %v251 = vpop.xlane.xlu0 %250
      %252 = vadd.xlane.f32.xlu0 %v232
      %v253 = vpop.xlane.xlu0 %252
      %254 = vadd.xlane.f32.xlu0 %v233
      %v255 = vpop.xlane.xlu0 %254
      %256 = vadd.xlane.f32.xlu0 %v234
      %v257 = vpop.xlane.xlu0 %256
      %258 = vadd.xlane.f32.xlu0 %v235
      %v259 = vpop.xlane.xlu0 %258
      %260 = vadd.xlane.f32.xlu0 %v236
      %v261 = vpop.xlane.xlu0 %260
      %262 = vadd.xlane.f32.xlu0 %v237
      %v263 = vpop.xlane.xlu0 %262
      %264 = vadd.xlane.f32.xlu0 %v238
      %v265 = vpop.xlane.xlu0 %264
      %266 = vadd.xlane.f32.xlu0 %v239
      %v267 = vpop.xlane.xlu0 %266
      %268 = vadd.xlane.f32.xlu0 %v240
      %v269 = vpop.xlane.xlu0 %268
      %270 = vadd.xlane.f32.xlu0 %v241
      %v271 = vpop.xlane.xlu0 %270
      %272 = vadd.xlane.f32.xlu0 %v242
      %v273 = vpop.xlane.xlu0 %272
      %274 = vadd.xlane.f32.xlu0 %v243
      %v275 = vpop.xlane.xlu0 %274
      %v276 = vld [vmem:[#allocation3] sm:$0xff]
      %v277 = vld [vmem:[#allocation3 + $0x8] sm:$0xff]
      %v278 = vld [vmem:[#allocation3 + $0x10] sm:$0xff]
      %v279 = vld [vmem:[#allocation3 + $0x18] sm:$0xff]
      %v280 = vld [vmem:[#allocation3 + $0x20] sm:$0xff]
      %v281 = vld [vmem:[#allocation3 + $0x28] sm:$0xff]
      %v282 = vld [vmem:[#allocation3 + $0x30] sm:$0xff]
      %v283 = vld [vmem:[#allocation3 + $0x38] sm:$0xff]
      %v284 = vld [vmem:[#allocation3 + $0x40] sm:$0xff]
      %v285 = vld [vmem:[#allocation3 + $0x48] sm:$0xff]
      %v286 = vld [vmem:[#allocation3 + $0x50] sm:$0xff]
      %v287 = vld [vmem:[#allocation3 + $0x58] sm:$0xff]
      %v288 = vld [vmem:[#allocation3 + $0x60] sm:$0xff]
      %v289 = vld [vmem:[#allocation3 + $0x68] sm:$0xff]
      %v290 = vld [vmem:[#allocation3 + $0x70] sm:$0xff]
      %v291 = vld [vmem:[#allocation3 + $0x78] sm:$0xff]
      %292 = vmax.xlane.f32.xlu0 %v276
      %v293 = vpop.xlane.xlu0 %292
      %294 = vmax.xlane.f32.xlu0 %v277
      %v295 = vpop.xlane.xlu0 %294
      %296 = vmax.xlane.f32.xlu0 %v278
      %v297 = vpop.xlane.xlu0 %296
      %298 = vmax.xlane.f32.xlu0 %v279
      %v299 = vpop.xlane.xlu0 %298
      %300 = vmax.xlane.f32.xlu0 %v280
      %v301 = vpop.xlane.xlu0 %300
      %302 = vmax.xlane.f32.xlu0 %v281
      %v303 = vpop.xlane.xlu0 %302
      %304 = vmax.xlane.f32.xlu0 %v282
      %v305 = vpop.xlane.xlu0 %304
      %306 = vmax.xlane.f32.xlu0 %v283
      %v307 = vpop.xlane.xlu0 %306
      %308 = vmax.xlane.f32.xlu0 %v284
      %v309 = vpop.xlane.xlu0 %308
      %310 = vmax.xlane.f32.xlu0 %v285
      %v311 = vpop.xlane.xlu0 %310
      %312 = vmax.xlane.f32.xlu0 %v286
      %v313 = vpop.xlane.xlu0 %312
      %314 = vmax.xlane.f32.xlu0 %v287
      %v315 = vpop.xlane.xlu0 %314
      %316 = vmax.xlane.f32.xlu0 %v288
      %v317 = vpop.xlane.xlu0 %316
      %318 = vmax.xlane.f32.xlu0 %v289
      %v319 = vpop.xlane.xlu0 %318
      %320 = vmax.xlane.f32.xlu0 %v290
      %v321 = vpop.xlane.xlu0 %320
      %322 = vmax.xlane.f32.xlu0 %v291
      %v323 = vpop.xlane.xlu0 %322
      %v324 = vmul.f32 %v245, 0.00390625
      %v325 = vmul.f32 %v247, 0.00390625
      %v326 = vmul.f32 %v249, 0.00390625
      %v327 = vmul.f32 %v251, 0.00390625
      %v328 = vmul.f32 %v253, 0.00390625
      %v329 = vmul.f32 %v255, 0.00390625
      %v330 = vmul.f32 %v257, 0.00390625
      %v331 = vmul.f32 %v259, 0.00390625
      %v332 = vmul.f32 %v261, 0.00390625
      %v333 = vmul.f32 %v263, 0.00390625
      %v334 = vmul.f32 %v265, 0.00390625
      %v335 = vmul.f32 %v267, 0.00390625
      %v336 = vmul.f32 %v269, 0.00390625
      %v337 = vmul.f32 %v271, 0.00390625
      %v338 = vmul.f32 %v273, 0.00390625
      %v339 = vmul.f32 %v275, 0.00390625
      %v356 = vlaneseq
      %v357 = vand.u32 %v356, 127
      %v358 = vlaneseq
      %v359 = vshrl.u32 %v358, 7
      %v360 = vsub.s32 %v357, %v359
      %v361 = vrot.slane %v324, %v360
      %v362 = vadd.s32 %v357, 4294967288
      %v363 = vlaneseq
      %v364 = vshrl.u32 %v363, 7
      %v365 = vsub.s32 %v362, %v364
      %v366 = vrot.slane %v325, %v365
      %vm367 = vcmask 130112
      %v368 = vsel %vm367, %v366, %v361
      %v369 = vadd.s32 %v357, 4294967280
      %v370 = vlaneseq
      %v371 = vshrl.u32 %v370, 7
      %v372 = vsub.s32 %v369, %v371
      %v373 = vrot.slane %v326, %v372
      %vm374 = vcmask 195712
      %v375 = vsel %vm374, %v373, %v368
      %v376 = vadd.s32 %v357, 4294967272
      %v377 = vlaneseq
      %v378 = vshrl.u32 %v377, 7
      %v379 = vsub.s32 %v376, %v378
      %v380 = vrot.slane %v327, %v379
      %vm381 = vcmask 261312
      %v382 = vsel %vm381, %v380, %v375
      %v383 = vadd.s32 %v357, 4294967264
      %v384 = vlaneseq
      %v385 = vshrl.u32 %v384, 7
      %v386 = vsub.s32 %v383, %v385
      %v387 = vrot.slane %v328, %v386
      %vm388 = vcmask 326912
      %v389 = vsel %vm388, %v387, %v382
      %v390 = vadd.s32 %v357, 4294967256
      %v391 = vlaneseq
      %v392 = vshrl.u32 %v391, 7
      %v393 = vsub.s32 %v390, %v392
      %v394 = vrot.slane %v329, %v393
      %vm395 = vcmask 392512
      %v396 = vsel %vm395, %v394, %v389
      %v397 = vadd.s32 %v357, 4294967248
      %v398 = vlaneseq
      %v399 = vshrl.u32 %v398, 7
      %v400 = vsub.s32 %v397, %v399
      %v401 = vrot.slane %v330, %v400
      %vm402 = vcmask 458112
      %v403 = vsel %vm402, %v401, %v396
      %v404 = vadd.s32 %v357, 4294967240
      %v405 = vlaneseq
      %v406 = vshrl.u32 %v405, 7
      %v407 = vsub.s32 %v404, %v406
      %v408 = vrot.slane %v331, %v407
      %vm409 = vcmask 523712
      %v410 = vsel %vm409, %v408, %v403
      %v411 = vlaneseq
      %v412 = vshrl.u32 %v411, 7
      %v413 = vsub.s32 %v357, %v412
      %v414 = vrot.slane %v332, %v413
      %v415 = vlaneseq
      %v416 = vshrl.u32 %v415, 7
      %v417 = vsub.s32 %v362, %v416
      %v418 = vrot.slane %v333, %v417
      %v419 = vsel %vm367, %v418, %v414
      %v420 = vlaneseq
      %v421 = vshrl.u32 %v420, 7
      %v422 = vsub.s32 %v369, %v421
      %v423 = vrot.slane %v334, %v422
      %v424 = vsel %vm374, %v423, %v419
      %v425 = vlaneseq
      %v426 = vshrl.u32 %v425, 7
      %v427 = vsub.s32 %v376, %v426
      %v428 = vrot.slane %v335, %v427
      %v429 = vsel %vm381, %v428, %v424
      %v430 = vlaneseq
      %v431 = vshrl.u32 %v430, 7
      %v432 = vsub.s32 %v383, %v431
      %v433 = vrot.slane %v336, %v432
      %v434 = vsel %vm388, %v433, %v429
      %v435 = vlaneseq
      %v436 = vshrl.u32 %v435, 7
      %v437 = vsub.s32 %v390, %v436
      %v438 = vrot.slane %v337, %v437
      %v439 = vsel %vm395, %v438, %v434
      %v440 = vlaneseq
      %v441 = vshrl.u32 %v440, 7
      %v442 = vsub.s32 %v397, %v441
      %v443 = vrot.slane %v338, %v442
      %v444 = vsel %vm402, %v443, %v439
      %v445 = vlaneseq
      %v446 = vshrl.u32 %v445, 7
      %v447 = vsub.s32 %v404, %v446
      %v448 = vrot.slane %v339, %v447
      %v449 = vsel %vm409, %v448, %v444
      %vm450 = vcmask 1041409
      %v451 = vsel %vm450, %v449, %v410
      %v469 = vlaneseq
      %v470 = vshrl.u32 %v469, 7
      %v471 = vsub.s32 %v357, %v470
      %v472 = vrot.slane %v293, %v471
      %v473 = vlaneseq
      %v474 = vshrl.u32 %v473, 7
      %v475 = vsub.s32 %v362, %v474
      %v476 = vrot.slane %v295, %v475
      %v477 = vsel %vm367, %v476, %v472
      %v478 = vlaneseq
      %v479 = vshrl.u32 %v478, 7
      %v480 = vsub.s32 %v369, %v479
      %v481 = vrot.slane %v297, %v480
      %v482 = vsel %vm374, %v481, %v477
      %v483 = vlaneseq
      %v484 = vshrl.u32 %v483, 7
      %v485 = vsub.s32 %v376, %v484
      %v486 = vrot.slane %v299, %v485
      %v487 = vsel %vm381, %v486, %v482
      %v488 = vlaneseq
      %v489 = vshrl.u32 %v488, 7
      %v490 = vsub.s32 %v383, %v489
      %v491 = vrot.slane %v301, %v490
      %v492 = vsel %vm388, %v491, %v487
      %v493 = vlaneseq
      %v494 = vshrl.u32 %v493, 7
      %v495 = vsub.s32 %v390, %v494
      %v496 = vrot.slane %v303, %v495
      %v497 = vsel %vm395, %v496, %v492
      %v498 = vlaneseq
      %v499 = vshrl.u32 %v498, 7
      %v500 = vsub.s32 %v397, %v499
      %v501 = vrot.slane %v305, %v500
      %v502 = vsel %vm402, %v501, %v497
      %v503 = vlaneseq
      %v504 = vshrl.u32 %v503, 7
      %v505 = vsub.s32 %v404, %v504
      %v506 = vrot.slane %v307, %v505
      %v507 = vsel %vm409, %v506, %v502
      %v508 = vlaneseq
      %v509 = vshrl.u32 %v508, 7
      %v510 = vsub.s32 %v357, %v509
      %v511 = vrot.slane %v309, %v510
      %v512 = vlaneseq
      %v513 = vshrl.u32 %v512, 7
      %v514 = vsub.s32 %v362, %v513
      %v515 = vrot.slane %v311, %v514
      %v516 = vsel %vm367, %v515, %v511
      %v517 = vlaneseq
      %v518 = vshrl.u32 %v517, 7
      %v519 = vsub.s32 %v369, %v518
      %v520 = vrot.slane %v313, %v519
      %v521 = vsel %vm374, %v520, %v516
      %v522 = vlaneseq
      %v523 = vshrl.u32 %v522, 7
      %v524 = vsub.s32 %v376, %v523
      %v525 = vrot.slane %v315, %v524
      %v526 = vsel %vm381, %v525, %v521
      %v527 = vlaneseq
      %v528 = vshrl.u32 %v527, 7
      %v529 = vsub.s32 %v383, %v528
      %v530 = vrot.slane %v317, %v529
      %v531 = vsel %vm388, %v530, %v526
      %v532 = vlaneseq
      %v533 = vshrl.u32 %v532, 7
      %v534 = vsub.s32 %v390, %v533
      %v535 = vrot.slane %v319, %v534
      %v536 = vsel %vm395, %v535, %v531
      %v537 = vlaneseq
      %v538 = vshrl.u32 %v537, 7
      %v539 = vsub.s32 %v397, %v538
      %v540 = vrot.slane %v321, %v539
      %v541 = vsel %vm402, %v540, %v536
      %v542 = vlaneseq
      %v543 = vshrl.u32 %v542, 7
      %v544 = vsub.s32 %v404, %v543
      %v545 = vrot.slane %v323, %v544
      %v546 = vsel %vm409, %v545, %v541
      %vm547 = vcmask 1043459
      %v548 = vsel %vm547, %v546, %v507
      %vm550 = vcmask 1041408
      %v551 = vsel %vm550, %v451, %v548
      %v552 = vld [vmem:[%s1] sm:$0xff]
      %v553 = vld [vmem:[%s1 + $0x8] sm:$0xff]
      %v554 = vld [vmem:[%s1 + $0x10] sm:$0xff]
      %v555 = vld [vmem:[%s1 + $0x18] sm:$0xff]
      %v556 = vld [vmem:[%s1 + $0x20] sm:$0xff]
      %v557 = vld [vmem:[%s1 + $0x28] sm:$0xff]
      %v558 = vld [vmem:[%s1 + $0x30] sm:$0xff]
      %v559 = vld [vmem:[%s1 + $0x38] sm:$0xff]
      %vm560 = vcmask 523264
      %v562 = vsel %vm560, %v551, 0
      %564 = vmatprep.subr.mxu0 0.0
      %565 = vmatpush1.msra.mxu0 %v552
      %566 = vmatprep.subr.mxu0 0.0
      %567 = vmatpush1.msra.mxu0 %v553
      %568 = vmatprep.subr.mxu0 0.0
      %569 = vmatpush1.msra.mxu0 %v554
      %570 = vmatprep.subr.mxu0 0.0
      %571 = vmatpush1.msra.mxu0 %v555
      %572 = vmatprep.subr.mxu0 0.0
      %573 = vmatpush1.msra.mxu0 %v556
      %574 = vmatprep.subr.mxu0 0.0
      %575 = vmatpush1.msra.mxu0 %v557
      %576 = vmatprep.subr.mxu0 0.0
      %577 = vmatpush1.msra.mxu0 %v558
      %578 = vmatprep.subr.mxu0 0.0
      %579 = vmatpush1.msra.mxu0 %v559
      %580 = vmatprep.subr.mxu0 0.0
      %581 = vmatpush1.msra.mxu0 0.0
      %582 = vmatprep.subr.mxu0 0.0
      %583 = vmatpush1.msra.mxu0 0.0
      %584 = vmatprep.subr.mxu0 0.0
      %585 = vmatpush1.msra.mxu0 0.0
      %586 = vmatprep.subr.mxu0 0.0
      %587 = vmatpush1.msra.mxu0 0.0
      %588 = vmatprep.subr.mxu0 0.0
      %589 = vmatpush1.msra.mxu0 0.0
      %590 = vmatprep.subr.mxu0 0.0
      %591 = vmatpush1.msra.mxu0 0.0
      %592 = vmatprep.subr.mxu0 0.0
      %593 = vmatpush1.msra.mxu0 0.0
      %594 = vmatprep.subr.mxu0 0.0
      %595 = vmatpush1.msra.mxu0 0.0
      %596 = vmatprep.subr.mxu0 0.0
      %597 = vmatpush1.msra.mxu0 0.0
      %598 = vmatprep.subr.mxu0 0.0
      %599 = vmatpush1.msra.mxu0 0.0
      %600 = vmatprep.subr.mxu0 0.0
      %601 = vmatpush1.msra.mxu0 0.0
      %602 = vmatprep.subr.mxu0 0.0
      %603 = vmatpush1.msra.mxu0 0.0
      %604 = vmatprep.subr.mxu0 0.0
      %605 = vmatpush1.msra.mxu0 0.0
      %606 = vmatprep.subr.mxu0 0.0
      %607 = vmatpush1.msra.mxu0 0.0
      %608 = vmatprep.subr.mxu0 0.0
      %609 = vmatpush1.msra.mxu0 0.0
      %610 = vmatprep.subr.mxu0 0.0
      %611 = vmatpush1.msra.mxu0 0.0
      %612 = vmatprep.subr.mxu0 0.0
      %613 = vmatpush1.msra.mxu0 0.0
      %614 = vmatprep.subr.mxu0 0.0
      %615 = vmatpush1.msra.mxu0 0.0
      %616 = vmatprep.subr.mxu0 0.0
      %617 = vmatpush1.msra.mxu0 0.0
      %618 = vmatprep.subr.mxu0 0.0
      %619 = vmatpush1.msra.mxu0 0.0
      %620 = vmatprep.subr.mxu0 0.0
      %621 = vmatpush1.msra.mxu0 0.0
      %622 = vmatprep.subr.mxu0 0.0
      %623 = vmatpush1.msra.mxu0 0.0
      %624 = vmatprep.subr.mxu0 0.0
      %625 = vmatpush1.msra.mxu0 0.0
      %626 = vmatprep.subr.mxu0 0.0
      %627 = vmatpush1.msra.mxu0 0.0
      %628 = vmatprep.mubr.f32.mxu0 0.0
      %629 = vmatmul.mubr.f32.gmra.mrb[0].mxu0 %v562
      %v630 = vpop.f32.mrb[0].mxu0
      %v631 = vadd.f32 0.0, %v630
      %v632 = vpop.f32.mrb[0].mxu0
      %633 = vdwg.mxu0
      %v634 = vmax.f32 %v631, 0.0
      %v635 = vld [vmem:[%s2] sm:$0xf]
      %vm636 = vcmask 31744
      %v638 = vsel %vm636, %v634, 0
      %vm640 = vcmask 1043456
      %v642 = vsel %vm640, %v635, 0
      %644 = vmatprep.subr.mxu0 0.0
      %645 = vmatpush1.msra.mxu0 %v642
      %646 = vmatprep.subr.mxu0 0.0
      %647 = vmatpush1.msra.mxu0 0.0
      %648 = vmatprep.subr.mxu0 0.0
      %649 = vmatpush1.msra.mxu0 0.0
      %650 = vmatprep.subr.mxu0 0.0
      %651 = vmatpush1.msra.mxu0 0.0
      %652 = vmatprep.subr.mxu0 0.0
      %653 = vmatpush1.msra.mxu0 0.0
      %654 = vmatprep.subr.mxu0 0.0
      %655 = vmatpush1.msra.mxu0 0.0
      %656 = vmatprep.subr.mxu0 0.0
      %657 = vmatpush1.msra.mxu0 0.0
      %658 = vmatprep.subr.mxu0 0.0
      %659 = vmatpush1.msra.mxu0 0.0
      %660 = vmatprep.subr.mxu0 0.0
      %661 = vmatpush1.msra.mxu0 0.0
      %662 = vmatprep.subr.mxu0 0.0
      %663 = vmatpush1.msra.mxu0 0.0
      %664 = vmatprep.subr.mxu0 0.0
      %665 = vmatpush1.msra.mxu0 0.0
      %666 = vmatprep.subr.mxu0 0.0
      %667 = vmatpush1.msra.mxu0 0.0
      %668 = vmatprep.subr.mxu0 0.0
      %669 = vmatpush1.msra.mxu0 0.0
      %670 = vmatprep.subr.mxu0 0.0
      %671 = vmatpush1.msra.mxu0 0.0
      %672 = vmatprep.subr.mxu0 0.0
      %673 = vmatpush1.msra.mxu0 0.0
      %674 = vmatprep.subr.mxu0 0.0
      %675 = vmatpush1.msra.mxu0 0.0
      %676 = vmatprep.subr.mxu0 0.0
      %677 = vmatpush1.msra.mxu0 0.0
      %678 = vmatprep.subr.mxu0 0.0
      %679 = vmatpush1.msra.mxu0 0.0
      %680 = vmatprep.subr.mxu0 0.0
      %681 = vmatpush1.msra.mxu0 0.0
      %682 = vmatprep.subr.mxu0 0.0
      %683 = vmatpush1.msra.mxu0 0.0
      %684 = vmatprep.subr.mxu0 0.0
      %685 = vmatpush1.msra.mxu0 0.0
      %686 = vmatprep.subr.mxu0 0.0
      %687 = vmatpush1.msra.mxu0 0.0
      %688 = vmatprep.subr.mxu0 0.0
      %689 = vmatpush1.msra.mxu0 0.0
      %690 = vmatprep.subr.mxu0 0.0
      %691 = vmatpush1.msra.mxu0 0.0
      %692 = vmatprep.subr.mxu0 0.0
      %693 = vmatpush1.msra.mxu0 0.0
      %694 = vmatprep.subr.mxu0 0.0
      %695 = vmatpush1.msra.mxu0 0.0
      %696 = vmatprep.subr.mxu0 0.0
      %697 = vmatpush1.msra.mxu0 0.0
      %698 = vmatprep.subr.mxu0 0.0
      %699 = vmatpush1.msra.mxu0 0.0
      %700 = vmatprep.subr.mxu0 0.0
      %701 = vmatpush1.msra.mxu0 0.0
      %702 = vmatprep.subr.mxu0 0.0
      %703 = vmatpush1.msra.mxu0 0.0
      %704 = vmatprep.subr.mxu0 0.0
      %705 = vmatpush1.msra.mxu0 0.0
      %706 = vmatprep.subr.mxu0 0.0
      %707 = vmatpush1.msra.mxu0 0.0
      %708 = vmatprep.mubr.f32.mxu0 0.0
      %709 = vmatmul.mubr.f32.gmra.mrb[0].mxu0 %v638
      %v710 = vpop.f32.mrb[0].mxu0
      %v711 = vadd.f32 0.0, %v710
      %v712 = vpop.f32.mrb[0].mxu0
      %713 = vdwg.mxu0
      %v715 = vrot.slane %v711, 2
      %v717 = vadd.f32 %v711, %v715
      %v718 = vxor.u32 %v717, 2147483648
      %v719 = vmul.f32 %v718, 1.442695
      %v720 = vpow.pop %v719
      %v721 = vadd.f32 %v720, 1.0
      %v722 = vrcp.pop %v721
      %v723 = vmul.f32 1.0, %v722
      %vm724 = vcmask 517120
      %725 = vst.msk [vmem:[#allocation7] sm:$0x3] %vm724, %v723
    $region25: #{tpu_custom_call.1} parent=1 // pred_fallthru
      _
    // Predicated region
    $region26: #{tpu_custom_call.1} parent=1 // pred_check
      _
    $region27: #{tpu_custom_call.1} parent=1 // pred_check_branch
      %727 = sbr.rel (0) target = $region29
    $region28: #{tpu_custom_call.1} parent=1 // pred_region
      %s729 = ssub.s32 32, 32
      %730 = vsyncadd [#allocation6], %s729
      %s732 = sshll.u32 [#allocation7], 4
      %s733 = int_to_ptr.vmem [resolvable:$true] %s732
      %735 = dma.vmem_to_hbm [thread:$0]  %s733, 32, %s3, [#allocation6]
    $region29: #{tpu_custom_call.1} parent=1 // pred_fallthru
      _
    // Predicated region
    $region30: #{tpu_custom_call.1} parent=1 // pred_check
      _
    $region31: #{tpu_custom_call.1} parent=1 // pred_check_branch
      %737 = sbr.rel (0) target = $region33
    $region32: #{tpu_custom_call.1} parent=1 // pred_region
      %738 = dma.done [#allocation6], 32
    $region33: #{tpu_custom_call.1} parent=1 // pred_fallthru
      _
    %739 = vsyncpa [#allocation5], 1
    %740 = vsyncpa [#allocation6], 1

</llo_original>
